<compile_context>
chip_gen: v7x
topology: tpu7x:2x2x1
jax: 0.10.0
libtpu: 0.0.40
codegen_flags: <defaults>
</compile_context>

<pallas_src>
import functools
import math

import jax
import jax.numpy as jnp
from jax import lax
from jax.experimental import pallas as pl
from jax.experimental.pallas import tpu as pltpu

_LANES = 512            # lane-dense last dim (multiple of 128)
_MAX_TILE_ROWS = 1024   # 2 MiB f32 blocks at 512 lanes
_TWO_PI = 2.0 * math.pi
_PI = math.pi


# ----------------------------------------------------------------------------
# Shared helpers
# ----------------------------------------------------------------------------
def _bits_to_unit_float(bits_u32):
    """23 random bits -> f32 uniform in [0, 1) via the mantissa trick."""
    f = lax.bitcast_convert_type(
        (bits_u32 >> jnp.uint32(9)) | jnp.uint32(0x3F800000), jnp.float32)
    return f - jnp.float32(1.0)


def _box_muller_store(x_ref, o_ref, std, bits_u, bits_t, half):
    """Box-Muller from two uint32 bit planes; derives sin from cos (no sin())."""
    u1 = jnp.float32(1.0) - _bits_to_unit_float(bits_u)          # (0, 1]
    theta = _bits_to_unit_float(bits_t) * jnp.float32(_TWO_PI)   # [0, 2pi)
    rad = jnp.sqrt(jnp.float32(-2.0) * jnp.log(u1))
    c = jnp.cos(theta)
    # sin(theta) = sign(pi - theta) * sqrt(1 - cos^2(theta)): one EUP sqrt +
    # one select + mul instead of a second trig polynomial on the VALU.
    sgn = jnp.where(theta < jnp.float32(_PI), jnp.float32(1.0), jnp.float32(-1.0))
    sn = sgn * jnp.sqrt(jnp.maximum(jnp.float32(1.0) - c * c, jnp.float32(0.0)))
    o_ref[0, :half, :] = x_ref[:half, :] + std * (rad * c)
    o_ref[0, half:, :] = x_ref[half:, :] + std * (rad * sn)


# ----------------------------------------------------------------------------
# Kernels
# ----------------------------------------------------------------------------
def _noise_kernel_hw(tile_axis, sample_axis, seed_ref, std_ref, x_ref, o_ref):
    """Hardware-PRNG path (real TPU)."""
    t = pl.program_id(tile_axis)
    s = pl.program_id(sample_axis)
    tile_r, lanes = x_ref.shape
    half = tile_r // 2

    # Seed once per grid step from (user seed, sample, tile): every
    # (sample, tile) output block draws an independent, reproducible stream.
    pltpu.prng_seed(seed_ref[0], s, t)
    bits_u = lax.bitcast_convert_type(
        pltpu.prng_random_bits((half, lanes)), jnp.uint32)
    bits_t = lax.bitcast_convert_type(
        pltpu.prng_random_bits((half, lanes)), jnp.uint32)

    _box_muller_store(x_ref, o_ref, std_ref[0], bits_u, bits_t, half)


def _mix32(x):
    """Murmur3-style 32-bit finalizer (VPU-only ops) — fallback PRNG."""
    x = x * jnp.uint32(0x9E3779B1)
    x = x ^ (x >> jnp.uint32(16))
    x = x * jnp.uint32(0x85EBCA6B)
    x = x ^ (x >> jnp.uint32(13))
    x = x * jnp.uint32(0xC2B2AE35)
    x = x ^ (x >> jnp.uint32(16))
    return x


def _noise_kernel_sw(tile_axis, sample_axis, seed_ref, std_ref, x_ref, o_ref):
    """Counter-hash fallback (non-TPU backends / interpret mode)."""
    t = pl.program_id(tile_axis)
    s = pl.program_id(sample_axis)
    tile_r, lanes = x_ref.shape
    half = tile_r // 2

    # Grid-invariant vector counter (hoistable by Mosaic); the per-step
    # (seed, sample, tile) offsets are folded into the scalar keys.
    row = lax.broadcasted_iota(jnp.uint32, (half, lanes), 0)
    col = lax.broadcasted_iota(jnp.uint32, (half, lanes), 1)
    elem = row * jnp.uint32(lanes) + col

    base = (seed_ref[0].astype(jnp.uint32) * jnp.uint32(0x9E3779B9)
            + s.astype(jnp.uint32) * jnp.uint32(0x7FEB352D)
            + t.astype(jnp.uint32) * jnp.uint32(half * lanes))
    key2 = base ^ jnp.uint32(0x68E31DA4)

    bits_u = _mix32(elem + base)
    bits_t = _mix32(elem + key2)

    _box_muller_store(x_ref, o_ref, std_ref[0], bits_u, bits_t, half)


# ----------------------------------------------------------------------------
# Wrapper
# ----------------------------------------------------------------------------
def _round_up(a, b):
    return ((a + b - 1) // b) * b


def additive_gaussian_noise(x, num_samples, logvar, seed=0, use_hw_prng=None):
    """Forward of AdditiveGaussianNoise: returns (num_samples, *x.shape) f32."""
    if use_hw_prng is None:
        use_hw_prng = jax.default_backend() == "tpu"

    orig_shape = tuple(x.shape)
    x_flat = x.reshape(-1).astype(jnp.float32)
    total = x_flat.shape[0]

    lanes = _LANES
    rows = pl.cdiv(total, lanes)
    # Multiple of 16 so each Box-Muller half is sublane-aligned (8); capped so
    # double-buffered in+out blocks stay well within VMEM on every chip.
    tile_r = min(_MAX_TILE_ROWS, _round_up(rows, 16))
    rows_pad = _round_up(rows, tile_r)
    pad = rows_pad * lanes - total
    if pad:  # pad (extra HBM copy) only when the shape is ragged
        x_flat = jnp.pad(x_flat, (0, pad))
    x2 = x_flat.reshape(rows_pad, lanes)
    num_tiles = rows_pad // tile_r

    seed_arr = jnp.array([seed], jnp.int32)
    # std = exp(0.5 * logvar): module's logvar is a scalar (buffer or 1-elem
    # Parameter), so the scalar exp lives in the wrapper and rides in SMEM.
    std_arr = jnp.exp(jnp.float32(0.5) * jnp.asarray(logvar, jnp.float32)).reshape(1)

    # Grid ordering: tile-outer so the x tile stays VMEM-resident across the
    # sample axis (DMA'd from HBM once per tile).  If there is only one tile,
    # put the sample axis first instead so v7x's two TensorCores both get work
    # on the leading "parallel" axis (x's block index is constant either way,
    # so it is still fetched only once).
    if num_tiles >= 2 or num_samples == 1:
        grid = (num_tiles, num_samples)
        tile_axis, sample_axis = 0, 1
        x_index = lambda t, s: (t, 0)
        out_index = lambda t, s: (s, t, 0)
    else:
        grid = (num_samples, num_tiles)
        tile_axis, sample_axis = 1, 0
        x_index = lambda s, t: (t, 0)
        out_index = lambda s, t: (s, t, 0)

    kernel = functools.partial(
        _noise_kernel_hw if use_hw_prng else _noise_kernel_sw,
        tile_axis, sample_axis)

    out_elems = num_samples * rows_pad * lanes
    cost = pl.CostEstimate(
        flops=22 * out_elems,
        transcendentals=2 * out_elems,                    # log+cos per pair, 2x sqrt
        bytes_accessed=4 * (rows_pad * lanes + out_elems),
    )

    out = pl.pallas_call(
        kernel,
        out_shape=jax.ShapeDtypeStruct((num_samples, rows_pad, lanes), jnp.float32),
        grid=grid,
        in_specs=[
            pl.BlockSpec(memory_space=pltpu.MemorySpace.SMEM),   # seed (1,) i32
            pl.BlockSpec(memory_space=pltpu.MemorySpace.SMEM),   # std  (1,) f32
            pl.BlockSpec((tile_r, lanes), x_index),
        ],
        out_specs=pl.BlockSpec((1, tile_r, lanes), out_index),
        compiler_params=pltpu.CompilerParams(
            dimension_semantics=("parallel", "parallel"),
            vmem_limit_bytes=32 * 1024 * 1024,
        ),
        cost_estimate=cost,
    )(seed_arr, std_arr, x2)

    out = out.reshape(num_samples, rows_pad * lanes)[:, :total]
    return out.reshape((num_samples,) + orig_shape)


if __name__ == "__main__":
    # Deterministic "module init": logvar buffer (train_noise_var=False).
    logvar = math.log(1.0 / 255.0 ** 2)

    key = jax.random.PRNGKey(0)
    x = jax.random.normal(key, (2, 4, 16, 16), dtype=jnp.float32)  # NCHW
    num_samples = 3

    samples = additive_gaussian_noise(x, num_samples, logvar, seed=1234)
    samples = jax.block_until_ready(samples)

    assert samples.shape == (num_samples, 2, 4, 16, 16)
    assert samples.dtype == jnp.float32
    assert bool(jnp.all(jnp.isfinite(samples)))

    # Sanity: noise should be ~N(0, (1/255)^2) and differ across samples.
    noise = samples - x[None]
    emp_std = float(jnp.std(noise))
    emp_mean = float(jnp.mean(noise))
    assert abs(emp_std - 1.0 / 255.0) < 0.5 / 255.0, emp_std
    assert abs(emp_mean) < 0.5 / 255.0, emp_mean
    assert float(jnp.max(jnp.abs(samples[0] - samples[1]))) > 0.0

    print("KERNEL_OK")
</pallas_src>

<mosaic_0001>
module attributes {stable_mosaic.version = 11 : i64} {
  func.func @_noise_kernel_sw(%arg0: i32, %arg1: i32, %arg2: memref<1xi32, #tpu.memory_space<smem>>, %arg3: memref<1xf32, #tpu.memory_space<smem>>, %arg4: memref<16x512xf32, #tpu.memory_space<vmem>>, %arg5: memref<1x16x512xf32, #tpu.memory_space<vmem>>) attributes {dimension_semantics = [#tpu.dimension_semantics<parallel>, #tpu.dimension_semantics<parallel>], iteration_bounds = array<i64: 3, 1>, scalar_prefetch = 0 : i64, scratch_operands = 0 : i64, tpu.core_type = #tpu.core_type<tc>, window_params = [{transform_indices = @transform_0, window_bounds = array<i64: 1>}, {transform_indices = @transform_1, window_bounds = array<i64: 1>}, {transform_indices = @transform_2, window_bounds = array<i64: 16, 512>}, {transform_indices = @transform_3, window_bounds = array<i64: 1, 16, 512>}]} {
    %0 = tpu.iota {dimensions = array<i32: 0>} : vector<8x512xi32>
    %1 = tpu.iota {dimensions = array<i32: 1>} : vector<8x512xi32>
    %c512_i32 = arith.constant 512 : i32
    %2 = vector.broadcast %c512_i32 : i32 to vector<8x512xi32>
    %3 = arith.muli %0, %2 : vector<8x512xi32>
    %4 = arith.addi %3, %1 : vector<8x512xi32>
    %c0 = arith.constant 0 : index
    %5 = memref.load %arg2[%c0] : memref<1xi32, #tpu.memory_space<smem>>
    %c-1640531527_i32 = arith.constant -1640531527 : i32
    %6 = arith.muli %5, %c-1640531527_i32 : i32
    %c2146121005_i32 = arith.constant 2146121005 : i32
    %7 = arith.muli %arg0, %c2146121005_i32 : i32
    %8 = arith.addi %6, %7 : i32
    %c4096_i32 = arith.constant 4096 : i32
    %9 = arith.muli %arg1, %c4096_i32 : i32
    %10 = arith.addi %8, %9 : i32
    %c1759714724_i32 = arith.constant 1759714724 : i32
    %11 = arith.xori %10, %c1759714724_i32 : i32
    %12 = vector.broadcast %10 : i32 to vector<8x512xi32>
    %13 = arith.addi %4, %12 : vector<8x512xi32>
    %c-1640531535_i32 = arith.constant -1640531535 : i32
    %14 = vector.broadcast %c-1640531535_i32 : i32 to vector<8x512xi32>
    %15 = arith.muli %13, %14 : vector<8x512xi32>
    %c16_i32 = arith.constant 16 : i32
    %16 = vector.broadcast %c16_i32 : i32 to vector<8x512xi32>
    %17 = arith.shrui %15, %16 : vector<8x512xi32>
    %18 = arith.xori %15, %17 : vector<8x512xi32>
    %c-2048144789_i32 = arith.constant -2048144789 : i32
    %19 = vector.broadcast %c-2048144789_i32 : i32 to vector<8x512xi32>
    %20 = arith.muli %18, %19 : vector<8x512xi32>
    %c13_i32 = arith.constant 13 : i32
    %21 = vector.broadcast %c13_i32 : i32 to vector<8x512xi32>
    %22 = arith.shrui %20, %21 : vector<8x512xi32>
    %23 = arith.xori %20, %22 : vector<8x512xi32>
    %c-1028477387_i32 = arith.constant -1028477387 : i32
    %24 = vector.broadcast %c-1028477387_i32 : i32 to vector<8x512xi32>
    %25 = arith.muli %23, %24 : vector<8x512xi32>
    %c16_i32_0 = arith.constant 16 : i32
    %26 = vector.broadcast %c16_i32_0 : i32 to vector<8x512xi32>
    %27 = arith.shrui %25, %26 : vector<8x512xi32>
    %28 = arith.xori %25, %27 : vector<8x512xi32>
    %29 = vector.broadcast %11 : i32 to vector<8x512xi32>
    %30 = arith.addi %4, %29 : vector<8x512xi32>
    %c-1640531535_i32_1 = arith.constant -1640531535 : i32
    %31 = vector.broadcast %c-1640531535_i32_1 : i32 to vector<8x512xi32>
    %32 = arith.muli %30, %31 : vector<8x512xi32>
    %c16_i32_2 = arith.constant 16 : i32
    %33 = vector.broadcast %c16_i32_2 : i32 to vector<8x512xi32>
    %34 = arith.shrui %32, %33 : vector<8x512xi32>
    %35 = arith.xori %32, %34 : vector<8x512xi32>
    %c-2048144789_i32_3 = arith.constant -2048144789 : i32
    %36 = vector.broadcast %c-2048144789_i32_3 : i32 to vector<8x512xi32>
    %37 = arith.muli %35, %36 : vector<8x512xi32>
    %c13_i32_4 = arith.constant 13 : i32
    %38 = vector.broadcast %c13_i32_4 : i32 to vector<8x512xi32>
    %39 = arith.shrui %37, %38 : vector<8x512xi32>
    %40 = arith.xori %37, %39 : vector<8x512xi32>
    %c-1028477387_i32_5 = arith.constant -1028477387 : i32
    %41 = vector.broadcast %c-1028477387_i32_5 : i32 to vector<8x512xi32>
    %42 = arith.muli %40, %41 : vector<8x512xi32>
    %c16_i32_6 = arith.constant 16 : i32
    %43 = vector.broadcast %c16_i32_6 : i32 to vector<8x512xi32>
    %44 = arith.shrui %42, %43 : vector<8x512xi32>
    %45 = arith.xori %42, %44 : vector<8x512xi32>
    %c0_7 = arith.constant 0 : index
    %46 = memref.load %arg3[%c0_7] : memref<1xf32, #tpu.memory_space<smem>>
    %c9_i32 = arith.constant 9 : i32
    %47 = vector.broadcast %c9_i32 : i32 to vector<8x512xi32>
    %48 = arith.shrui %28, %47 : vector<8x512xi32>
    %c1065353216_i32 = arith.constant 1065353216 : i32
    %49 = vector.broadcast %c1065353216_i32 : i32 to vector<8x512xi32>
    %50 = arith.ori %48, %49 : vector<8x512xi32>
    %51 = tpu.bitcast %50 : vector<8x512xi32> -> vector<8x512xf32>
    %cst = arith.constant 1.000000e+00 : f32
    %52 = vector.broadcast %cst : f32 to vector<8x512xf32>
    %53 = arith.subf %51, %52 : vector<8x512xf32>
    %cst_8 = arith.constant 1.000000e+00 : f32
    %54 = vector.broadcast %cst_8 : f32 to vector<8x512xf32>
    %55 = arith.subf %54, %53 : vector<8x512xf32>
    %c9_i32_9 = arith.constant 9 : i32
    %56 = vector.broadcast %c9_i32_9 : i32 to vector<8x512xi32>
    %57 = arith.shrui %45, %56 : vector<8x512xi32>
    %c1065353216_i32_10 = arith.constant 1065353216 : i32
    %58 = vector.broadcast %c1065353216_i32_10 : i32 to vector<8x512xi32>
    %59 = arith.ori %57, %58 : vector<8x512xi32>
    %60 = tpu.bitcast %59 : vector<8x512xi32> -> vector<8x512xf32>
    %cst_11 = arith.constant 1.000000e+00 : f32
    %61 = vector.broadcast %cst_11 : f32 to vector<8x512xf32>
    %62 = arith.subf %60, %61 : vector<8x512xf32>
    %cst_12 = arith.constant 6.28318548 : f32
    %63 = vector.broadcast %cst_12 : f32 to vector<8x512xf32>
    %64 = arith.mulf %62, %63 : vector<8x512xf32>
    %65 = math.log %55 : vector<8x512xf32>
    %cst_13 = arith.constant -2.000000e+00 : f32
    %66 = vector.broadcast %cst_13 : f32 to vector<8x512xf32>
    %67 = arith.mulf %66, %65 : vector<8x512xf32>
    %68 = math.sqrt %67 : vector<8x512xf32>
    %69 = math.cos %64 : vector<8x512xf32>
    %cst_14 = arith.constant 3.14159274 : f32
    %70 = vector.broadcast %cst_14 : f32 to vector<8x512xf32>
    %71 = arith.cmpf olt, %64, %70 : vector<8x512xf32>
    %cst_15 = arith.constant 1.000000e+00 : f32
    %cst_16 = arith.constant -1.000000e+00 : f32
    %72 = vector.broadcast %cst_15 : f32 to vector<8x512xf32>
    %73 = vector.broadcast %cst_16 : f32 to vector<8x512xf32>
    %74 = arith.select %71, %72, %73 : vector<8x512xi1>, vector<8x512xf32>
    %75 = arith.mulf %69, %69 : vector<8x512xf32>
    %cst_17 = arith.constant 1.000000e+00 : f32
    %76 = vector.broadcast %cst_17 : f32 to vector<8x512xf32>
    %77 = arith.subf %76, %75 : vector<8x512xf32>
    %cst_18 = arith.constant 0.000000e+00 : f32
    %78 = vector.broadcast %cst_18 : f32 to vector<8x512xf32>
    %79 = arith.maximumf %77, %78 : vector<8x512xf32>
    %80 = math.sqrt %79 : vector<8x512xf32>
    %81 = arith.mulf %74, %80 : vector<8x512xf32>
    %c0_19 = arith.constant 0 : index
    %c0_20 = arith.constant 0 : index
    %82 = vector.load %arg4[%c0_19, %c0_20] : memref<16x512xf32, #tpu.memory_space<vmem>>, vector<8x512xf32>
    %83 = arith.mulf %68, %69 : vector<8x512xf32>
    %84 = vector.broadcast %46 : f32 to vector<8x512xf32>
    %85 = arith.mulf %84, %83 : vector<8x512xf32>
    %86 = arith.addf %82, %85 : vector<8x512xf32>
    %c0_21 = arith.constant 0 : index
    %c0_22 = arith.constant 0 : index
    %c0_23 = arith.constant 0 : index
    %87 = vector.load %arg5[%c0_21, %c0_22, %c0_23] : memref<1x16x512xf32, #tpu.memory_space<vmem>>, vector<1x8x512xf32>
    %88 = vector.shape_cast %87 : vector<1x8x512xf32> to vector<8x512xf32>
    %89 = vector.shape_cast %86 : vector<8x512xf32> to vector<1x8x512xf32>
    tpu.vector_store %arg5[%c0_21, %c0_22, %c0_23], %89 {strides = array<i32>} : memref<1x16x512xf32, #tpu.memory_space<vmem>>, vector<1x8x512xf32>,
    %c8 = arith.constant 8 : index
    %c0_24 = arith.constant 0 : index
    %90 = vector.load %arg4[%c8, %c0_24] : memref<16x512xf32, #tpu.memory_space<vmem>>, vector<8x512xf32>
    %91 = arith.mulf %68, %81 : vector<8x512xf32>
    %92 = vector.broadcast %46 : f32 to vector<8x512xf32>
    %93 = arith.mulf %92, %91 : vector<8x512xf32>
    %94 = arith.addf %90, %93 : vector<8x512xf32>
    %c0_25 = arith.constant 0 : index
    %c8_26 = arith.constant 8 : index
    %c0_27 = arith.constant 0 : index
    %95 = vector.load %arg5[%c0_25, %c8_26, %c0_27] : memref<1x16x512xf32, #tpu.memory_space<vmem>>, vector<1x8x512xf32>
    %96 = vector.shape_cast %95 : vector<1x8x512xf32> to vector<8x512xf32>
    %97 = vector.shape_cast %94 : vector<8x512xf32> to vector<1x8x512xf32>
    tpu.vector_store %arg5[%c0_25, %c8_26, %c0_27], %97 {strides = array<i32>} : memref<1x16x512xf32, #tpu.memory_space<vmem>>, vector<1x8x512xf32>,
    return
  }
  func.func @transform_0(%arg0: i32, %arg1: i32) -> i32 {
    %c0_i32 = arith.constant 0 : i32
    %c0_i32_0 = arith.constant 0 : i32
    return %c0_i32 : i32
  }
  func.func @transform_1(%arg0: i32, %arg1: i32) -> i32 {
    %c0_i32 = arith.constant 0 : i32
    %c0_i32_0 = arith.constant 0 : i32
    return %c0_i32 : i32
  }
  func.func @transform_2(%arg0: i32, %arg1: i32) -> (i32, i32) {
    %c0_i32 = arith.constant 0 : i32
    %c0_i32_0 = arith.constant 0 : i32
    return %arg1, %c0_i32 : i32, i32
  }
  func.func @transform_3(%arg0: i32, %arg1: i32) -> (i32, i32, i32) {
    %c0_i32 = arith.constant 0 : i32
    %c0_i32_0 = arith.constant 0 : i32
    return %arg0, %arg1, %c0_i32 : i32, i32, i32
  }
}

</mosaic_0001>

<llo_original>
// kernel: tpu_custom_call.1
$region0: #{tpu_custom_call.1}
  #allocation0 [shape = 'u32[]', space=smem, size = 0x4, offset = 0x4, fixed_abs, tag = 'smem constant byte address 0x4 - core index']
  #allocation1 [shape = 'u32[144,128]{1,0:T(1,128)}', space=vmem, size = 0x12000, scoped, tag = 'internal scratch']
  #allocation2 [shape = 's32[1]{0:T(128)S(6)}', space=smem, size = 0x200, scoped, tag = 'scoped memory for tpu_custom_call.1']
  #allocation3 [shape = 'f32[1]{0:T(128)S(6)}', space=smem, size = 0x200, scoped, tag = 'scoped memory for tpu_custom_call.1']
  %s0 = inlined_call_operand.<no memory space> [shape: s32[1], index: 0, kind: input, shape index: {}]
  %s1 = inlined_call_operand.<no memory space> [shape: f32[1], index: 1, kind: input, shape index: {}]
  %s2 = inlined_call_operand.hbm [shape: f32[16,512], index: 2, kind: input, shape index: {}]
  %s3 = inlined_call_operand.hbm [shape: f32[3,16,512], index: 3, kind: output, shape index: {}]
  %s4 = sld [smem:[#allocation0]]
  $region49: #{tpu_custom_call.1} parent=0
    _
  %s6 = ssub.s32 1, %s4
  %s7 = scalar_select 0, %s6, %s4
  %8 = sst [smem:[#allocation2]] %s0
  %9 = sst [smem:[#allocation3]] %s1
  $region1: #{tpu_custom_call.1} parent=0
    #allocation4 [shape = 'u8[32768]{0}', space=vmem, size = 0x8000, scoped, tag = 'input window, operand 2, single buffered']
    #allocation5 [shape = 's32[2]{0}', space=sflag, size = 0x8, scoped, tag = 'scoped memory for tpu_custom_call.1']
    #allocation6 [shape = 's32[2]{0}', space=sflag, size = 0x8, scoped, tag = 'scoped memory for tpu_custom_call.1']
    #allocation7 [shape = 'u8[65536]{0}', space=vmem, size = 0x10000, scoped, tag = 'output window, operand 0']
    %10 = vsyncpa [#allocation5], 0
    %11 = vsyncpa [#allocation6], 0
    %s12 = scalar_lea.sflag [#allocation6], 1
    %13 = vsyncpa %s12, 0
    loop: start=0, step=1, limit=5
    $region2: #{tpu_custom_call.1} parent=1 // loop_pre_header
      _
    $region3: #{tpu_custom_call.1} parent=1 // loop_header
      %s15 = sphi 0, %s19
      %p16 = scmp.ge.s32.totalorder %s15, 5
      %s22 = sphi 0, %s34
      %s23 = sphi 0, %s30
      %s24 = sphi 0, %s22
      %s25 = sphi 0, %s23
      %s26 = sphi 0, %s24
      %s27 = sphi 0, %s25
      %s35 = sphi 0, %s35
      %s37 = sphi 0, %s35
      %s38 = sphi 0, %s37
      %s52 = sphi 0, %s38
      %s56 = sphi 0, %s56
      %s58 = sphi 0, %s56
      %s59 = sphi 0, %s58
      %s73 = sphi 0, %s59
      %s79 = sphi 0, %s81
      %s82 = sphi 0, %s79
      %s83 = sphi 0, %s82
      %s99 = sphi 0, %s83
      %s107 = sphi 0, %s109
      %s110 = sphi 0, %s107
      %s111 = sphi 0, %s110
      %s127 = sphi 0, %s111
    $region4: #{tpu_custom_call.1} parent=1 // loop_header_branch
      %18 = sbr.rel (%p16) target = $region8
    $region5: #{tpu_custom_call.1} parent=1 // loop_body
      %s20 = ssub.s32 %s15, 1
      %s21 = ssub.s32 %s15, 2
      %s28 = sadd.s32 1, %s23
      %p29 = scmp.ge.s32.totalorder %s28, 1
      %s30 = scalar_select %p29, 0, %s28
      %s31 = sadd.s32 1, %s22
      %s32 = scalar_select %p29, %s31, %s22
      %p33 = scmp.ge.s32.totalorder %s32, 3
      %s34 = scalar_select %p33, 0, %s32
      %s36 = sadd.s32 %s35, 1
      %p39 = scmp.eq.s32.totalorder %s15, 2
      %p40 = scmp.ne.s32.totalorder %s35, %s37
      %p41 = scmp.eq.s32.totalorder %s15, 0
      %p42 = por %p40, %p41
      %p43 = scmp.ne.s32.totalorder %s35, %s37
      %p44 = scmp.eq.s32.totalorder %s20, 2
      %p45 = por %p43, %p44
      %p46 = scmp.ne.s32.totalorder %s37, %s38
      %p47 = scmp.eq.s32.totalorder %s20, 0
      %p48 = por %p46, %p47
      %p49 = scmp.ne.s32.totalorder %s37, %s38
      %p50 = scmp.eq.s32.totalorder %s21, 2
      %p51 = por %p49, %p50
      %p53 = scmp.ne.s32.totalorder %s38, %s52
      %p54 = scmp.eq.s32.totalorder %s21, 0
      %p55 = por %p53, %p54
      %s57 = sadd.s32 %s56, 1
      %p60 = scmp.eq.s32.totalorder %s15, 2
      %p61 = scmp.ne.s32.totalorder %s56, %s58
      %p62 = scmp.eq.s32.totalorder %s15, 0
      %p63 = por %p61, %p62
      %p64 = scmp.ne.s32.totalorder %s56, %s58
      %p65 = scmp.eq.s32.totalorder %s20, 2
      %p66 = por %p64, %p65
      %p67 = scmp.ne.s32.totalorder %s58, %s59
      %p68 = scmp.eq.s32.totalorder %s20, 0
      %p69 = por %p67, %p68
      %p70 = scmp.ne.s32.totalorder %s58, %s59
      %p71 = scmp.eq.s32.totalorder %s21, 2
      %p72 = por %p70, %p71
      %p74 = scmp.ne.s32.totalorder %s59, %s73
      %p75 = scmp.eq.s32.totalorder %s21, 0
      %p76 = por %p74, %p75
      %s77 = ssub.s32 %s23, %s30
      %p78 = scmp.eq.s32.totalorder %s77, 0
      %s80 = sadd.s32 %s79, 1
      %s81 = scalar_select %p78, %s79, %s80
      %p84 = pneg %p78
      %p85 = scmp.eq.s32.totalorder %s15, 2
      %p86 = por %p84, %p85
      %p87 = scmp.ne.s32.totalorder %s79, %s82
      %p88 = scmp.eq.s32.totalorder %s15, 0
      %p89 = por %p87, %p88
      %p90 = scmp.ne.s32.totalorder %s79, %s82
      %p91 = scmp.eq.s32.totalorder %s20, 2
      %p92 = por %p90, %p91
      %p93 = scmp.ne.s32.totalorder %s82, %s83
      %p94 = scmp.eq.s32.totalorder %s20, 0
      %p95 = por %p93, %p94
      %p96 = scmp.ne.s32.totalorder %s82, %s83
      %p97 = scmp.eq.s32.totalorder %s21, 2
      %p98 = por %p96, %p97
      %p100 = scmp.ne.s32.totalorder %s83, %s99
      %p101 = scmp.eq.s32.totalorder %s21, 0
      %p102 = por %p100, %p101
      %s103 = ssub.s32 %s22, %s34
      %s104 = ssub.s32 %s23, %s30
      %s105 = sor.u32 %s103, %s104
      %p106 = scmp.eq.s32.totalorder %s105, 0
      %s108 = sadd.s32 %s107, 1
      %s109 = scalar_select %p106, %s107, %s108
      %p112 = pneg %p106
      %p113 = scmp.eq.s32.totalorder %s15, 2
      %p114 = por %p112, %p113
      %p115 = scmp.ne.s32.totalorder %s107, %s110
      %p116 = scmp.eq.s32.totalorder %s15, 0
      %p117 = por %p115, %p116
      %p118 = scmp.ne.s32.totalorder %s107, %s110
      %p119 = scmp.eq.s32.totalorder %s20, 2
      %p120 = por %p118, %p119
      %p121 = scmp.ne.s32.totalorder %s110, %s111
      %p122 = scmp.eq.s32.totalorder %s20, 0
      %p123 = por %p121, %p122
      %p124 = scmp.ne.s32.totalorder %s110, %s111
      %p125 = scmp.eq.s32.totalorder %s21, 2
      %p126 = por %p124, %p125
      %p128 = scmp.ne.s32.totalorder %s111, %s127
      %p129 = scmp.eq.s32.totalorder %s21, 0
      %p130 = por %p128, %p129
      %p131 = scmp.le.s32.totalorder 1, %s15
      %p132 = scmp.lt.s32.totalorder %s15, 4
      %p133 = pnand %p131, %p132
      %p134 = pneg %p133
      // Predicated region
      $region9: #{tpu_custom_call.1} parent=5 // pred_check
        _
      $region10: #{tpu_custom_call.1} parent=5 // pred_check_branch
        %136 = sbr.rel (%p133) target = $region12
      $region11: #{tpu_custom_call.1} parent=5 // pred_region
        %s137 = ssub.s32 %s15, 1
        // Predicated region
        $region13: #{tpu_custom_call.1} parent=11 // pred_check
          %p138 = pneg %p48
        $region14: #{tpu_custom_call.1} parent=11 // pred_check_branch
          %140 = sbr.rel (%p138) target = $region16
        $region15: #{tpu_custom_call.1} parent=11 // pred_region
          _
        $region16: #{tpu_custom_call.1} parent=11 // pred_fallthru
          _
        // Predicated region
        $region17: #{tpu_custom_call.1} parent=11 // pred_check
          %p141 = pneg %p69
        $region18: #{tpu_custom_call.1} parent=11 // pred_check_branch
          %143 = sbr.rel (%p141) target = $region20
        $region19: #{tpu_custom_call.1} parent=11 // pred_region
          _
        $region20: #{tpu_custom_call.1} parent=11 // pred_fallthru
          _
        // Predicated region
        $region21: #{tpu_custom_call.1} parent=11 // pred_check
          %p144 = pneg %p95
        $region22: #{tpu_custom_call.1} parent=11 // pred_check_branch
          %146 = sbr.rel (%p144) target = $region24
        $region23: #{tpu_custom_call.1} parent=11 // pred_region
          %s147 = smul.u32 2, %s25
          %s149 = ssub.s32 1024, 1024
          %150 = vsyncadd [#allocation5], %s149
          %s151 = smul.addr %s147, 4
          %s152 = smul.addr %s151, 128
          %s153 = scalar_lea.hbm %s2, %s152
          %s154 = sshll.u32 [#allocation4], 4
          %s155 = int_to_ptr.vmem [resolvable:$true] %s154
          %160 = dma.hbm_to_vmem [thread:$0]  %s153, 1024, %s155, [#allocation5], 512, 512, 32
        $region24: #{tpu_custom_call.1} parent=11 // pred_fallthru
          _
      $region12: #{tpu_custom_call.1} parent=5 // pred_fallthru
        _
      %p161 = scmp.lt.s32.totalorder %s15, 3
      // Predicated region
      $region25: #{tpu_custom_call.1} parent=5 // pred_check
        %p162 = pneg %p161
      $region26: #{tpu_custom_call.1} parent=5 // pred_check_branch
        %164 = sbr.rel (%p162) target = $region28
      $region27: #{tpu_custom_call.1} parent=5 // pred_region
        _
      $region28: #{tpu_custom_call.1} parent=5 // pred_fallthru
        _
      %p165 = scmp.le.s32.totalorder 1, %s15
      %p166 = scmp.lt.s32.totalorder %s15, 4
      %p167 = pnand %p165, %p166
      %p168 = pneg %p167
      // Predicated region
      $region29: #{tpu_custom_call.1} parent=5 // pred_check
        _
      $region30: #{tpu_custom_call.1} parent=5 // pred_check_branch
        %170 = sbr.rel (%p167) target = $region32
      $region31: #{tpu_custom_call.1} parent=5 // pred_region
        %s171 = ssub.s32 %s15, 1
        // Predicated region
        $region33: #{tpu_custom_call.1} parent=31 // pred_check
          %p172 = pneg %p95
        $region34: #{tpu_custom_call.1} parent=31 // pred_check_branch
          %174 = sbr.rel (%p172) target = $region36
        $region35: #{tpu_custom_call.1} parent=31 // pred_region
          %175 = dma.done [#allocation5], 1024
        $region36: #{tpu_custom_call.1} parent=31 // pred_fallthru
          _
        %p176 = pneg %p48
        %p177 = pneg %p45
        %p178 = pneg %p69
        %p179 = pneg %p66
        %p180 = pneg %p95
        %p181 = pneg %p92
        %p182 = pneg %p123
        %p183 = pneg %p120
        %s184 = sand.u32 %s110, 1
        %s185 = scalar_lea.sflag [#allocation6], %s184
        %s186 = sand.u32 %s110, 1
        %s187 = smul.addr %s186, 64
        %s188 = scalar_lea.vmem [#allocation7], %s187
        %s189 = smul.u32 2, %s25
        %s190 = smul.u32 2, %s25
        %v191 = vlaneseq
        %v192 = vshrl.u32 %v191, 7
        %v193 = vlaneseq
        %v194 = vand.u32 %v193, 127
        %v195 = vadd.s32 %v194, 128
        %v196 = vadd.s32 %v194, 256
        %v197 = vadd.s32 %v194, 384
        %v198 = vmul.u32 %v192, 512
        %v199 = vadd.s32 %v198, %v194
        %v200 = vadd.s32 %v198, %v195
        %v201 = vadd.s32 %v198, %v196
        %v202 = vadd.s32 %v198, %v197
        %s203 = sld [smem:[#allocation2]]
        %s204 = smul.u32 %s203, 2654435769
        %s205 = smul.u32 %s24, 2146121005
        %s206 = sadd.s32 %s204, %s205
        %s207 = smul.u32 %s25, 4096
        %s208 = sadd.s32 %s206, %s207
        %s209 = sxor.u32 %s208, 1759714724
        %v210 = vstv %s208
        %v211 = vadd.s32 %v199, %v210
        %v212 = vadd.s32 %v200, %v210
        %v213 = vadd.s32 %v201, %v210
        %v214 = vadd.s32 %v202, %v210
        %v215 = vmul.u32 %v211, 2654435761
        %v216 = vmul.u32 %v212, 2654435761
        %v217 = vmul.u32 %v213, 2654435761
        %v218 = vmul.u32 %v214, 2654435761
        %v219 = vshrl.u32 %v215, 16
        %v220 = vshrl.u32 %v216, 16
        %v221 = vshrl.u32 %v217, 16
        %v222 = vshrl.u32 %v218, 16
        %v223 = vxor.u32 %v215, %v219
        %v224 = vxor.u32 %v216, %v220
        %v225 = vxor.u32 %v217, %v221
        %v226 = vxor.u32 %v218, %v222
        %v227 = vmul.u32 %v223, 2246822507
        %v228 = vmul.u32 %v224, 2246822507
        %v229 = vmul.u32 %v225, 2246822507
        %v230 = vmul.u32 %v226, 2246822507
        %v231 = vshrl.u32 %v227, 13
        %v232 = vshrl.u32 %v228, 13
        %v233 = vshrl.u32 %v229, 13
        %v234 = vshrl.u32 %v230, 13
        %v235 = vxor.u32 %v227, %v231
        %v236 = vxor.u32 %v228, %v232
        %v237 = vxor.u32 %v229, %v233
        %v238 = vxor.u32 %v230, %v234
        %v239 = vmul.u32 %v235, 3266489909
        %v240 = vmul.u32 %v236, 3266489909
        %v241 = vmul.u32 %v237, 3266489909
        %v242 = vmul.u32 %v238, 3266489909
        %v243 = vshrl.u32 %v239, 16
        %v244 = vshrl.u32 %v240, 16
        %v245 = vshrl.u32 %v241, 16
        %v246 = vshrl.u32 %v242, 16
        %v247 = vxor.u32 %v239, %v243
        %v248 = vxor.u32 %v240, %v244
        %v249 = vxor.u32 %v241, %v245
        %v250 = vxor.u32 %v242, %v246
        %v251 = vstv %s209
        %v252 = vadd.s32 %v199, %v251
        %v253 = vadd.s32 %v200, %v251
        %v254 = vadd.s32 %v201, %v251
        %v255 = vadd.s32 %v202, %v251
        %v256 = vmul.u32 %v252, 2654435761
        %v257 = vmul.u32 %v253, 2654435761
        %v258 = vmul.u32 %v254, 2654435761
        %v259 = vmul.u32 %v255, 2654435761
        %v260 = vshrl.u32 %v256, 16
        %v261 = vshrl.u32 %v257, 16
        %v262 = vshrl.u32 %v258, 16
        %v263 = vshrl.u32 %v259, 16
        %v264 = vxor.u32 %v256, %v260
        %v265 = vxor.u32 %v257, %v261
        %v266 = vxor.u32 %v258, %v262
        %v267 = vxor.u32 %v259, %v263
        %v268 = vmul.u32 %v264, 2246822507
        %v269 = vmul.u32 %v265, 2246822507
        %v270 = vmul.u32 %v266, 2246822507
        %v271 = vmul.u32 %v267, 2246822507
        %v272 = vshrl.u32 %v268, 13
        %v273 = vshrl.u32 %v269, 13
        %v274 = vshrl.u32 %v270, 13
        %v275 = vshrl.u32 %v271, 13
        %v276 = vxor.u32 %v268, %v272
        %v277 = vxor.u32 %v269, %v273
        %v278 = vxor.u32 %v270, %v274
        %v279 = vxor.u32 %v271, %v275
        %v280 = vmul.u32 %v276, 3266489909
        %v281 = vmul.u32 %v277, 3266489909
        %v282 = vmul.u32 %v278, 3266489909
        %v283 = vmul.u32 %v279, 3266489909
        %v284 = vshrl.u32 %v280, 16
        %v285 = vshrl.u32 %v281, 16
        %v286 = vshrl.u32 %v282, 16
        %v287 = vshrl.u32 %v283, 16
        %v288 = vxor.u32 %v280, %v284
        %v289 = vxor.u32 %v281, %v285
        %v290 = vxor.u32 %v282, %v286
        %v291 = vxor.u32 %v283, %v287
        %s292 = sld [smem:[#allocation3]]
        %v293 = vshrl.u32 %v247, 9
        %v294 = vshrl.u32 %v248, 9
        %v295 = vshrl.u32 %v249, 9
        %v296 = vshrl.u32 %v250, 9
        %v297 = vor.u32 %v293, 1065353216
        %v298 = vor.u32 %v294, 1065353216
        %v299 = vor.u32 %v295, 1065353216
        %v300 = vor.u32 %v296, 1065353216
        %v305 = vsub.f32 %v297, 1.0
        %v306 = vsub.f32 %v298, 1.0
        %v307 = vsub.f32 %v299, 1.0
        %v308 = vsub.f32 %v300, 1.0
        %v309 = vsub.f32 1.0, %v305
        %v310 = vsub.f32 1.0, %v306
        %v311 = vsub.f32 1.0, %v307
        %v312 = vsub.f32 1.0, %v308
        %v313 = vshrl.u32 %v288, 9
        %v314 = vshrl.u32 %v289, 9
        %v315 = vshrl.u32 %v290, 9
        %v316 = vshrl.u32 %v291, 9
        %v317 = vor.u32 %v313, 1065353216
        %v318 = vor.u32 %v314, 1065353216
        %v319 = vor.u32 %v315, 1065353216
        %v320 = vor.u32 %v316, 1065353216
        %v325 = vsub.f32 %v317, 1.0
        %v326 = vsub.f32 %v318, 1.0
        %v327 = vsub.f32 %v319, 1.0
        %v328 = vsub.f32 %v320, 1.0
        %v329 = vmul.f32 %v325, 6.2831855
        %v330 = vmul.f32 %v326, 6.2831855
        %v331 = vmul.f32 %v327, 6.2831855
        %v332 = vmul.f32 %v328, 6.2831855
        %v333 = vlog2.pop %v309
        %v334 = vmul.f32 %v333, 0.6931472
        %v335 = vlog2.pop %v310
        %v336 = vmul.f32 %v335, 0.6931472
        %v337 = vlog2.pop %v311
        %v338 = vmul.f32 %v337, 0.6931472
        %v339 = vlog2.pop %v312
        %v340 = vmul.f32 %v339, 0.6931472
        %v341 = vmul.f32 %v334, -2.0
        %v342 = vmul.f32 %v336, -2.0
        %v343 = vmul.f32 %v338, -2.0
        %v344 = vmul.f32 %v340, -2.0
        %v345 = vrsqrt.pop %v341
        %v346 = vmul.f32 %v341, %v345
        %vm347 = vcmp.eq.f32.partialorder %v341, inf
        %v348 = vsel %vm347, %v341, %v346
        %vm349 = vcmp.eq.f32.partialorder %v341, 0.0
        %v350 = vand.u32 %v341, 2147483648
        %v351 = vsel %vm349, %v350, %v348
        %v352 = vrsqrt.pop %v342
        %v353 = vmul.f32 %v342, %v352
        %vm354 = vcmp.eq.f32.partialorder %v342, inf
        %v355 = vsel %vm354, %v342, %v353
        %vm356 = vcmp.eq.f32.partialorder %v342, 0.0
        %v357 = vand.u32 %v342, 2147483648
        %v358 = vsel %vm356, %v357, %v355
        %v359 = vrsqrt.pop %v343
        %v360 = vmul.f32 %v343, %v359
        %vm361 = vcmp.eq.f32.partialorder %v343, inf
        %v362 = vsel %vm361, %v343, %v360
        %vm363 = vcmp.eq.f32.partialorder %v343, 0.0
        %v364 = vand.u32 %v343, 2147483648
        %v365 = vsel %vm363, %v364, %v362
        %v366 = vrsqrt.pop %v344
        %v367 = vmul.f32 %v344, %v366
        %vm368 = vcmp.eq.f32.partialorder %v344, inf
        %v369 = vsel %vm368, %v344, %v367
        %vm370 = vcmp.eq.f32.partialorder %v344, 0.0
        %v371 = vand.u32 %v344, 2147483648
        %v372 = vsel %vm370, %v371, %v369
        %v373 = vand.u32 2147483647, %v329
        %vm374 = vcmp.le.f32.partialorder %v373, 0.7853982
        %vm375 = vcmp.lt.s32.totalorder %v329, 0
        %v376 = vand.u32 %v329, 2139095040
        %v377 = vshrl.u32 %v376, 23
        %v378 = vsub.s32 %v377, 127
        %v379 = vand.u32 2147483647, %v329
        %v380 = vand.u32 %v379, 8388607
        %v381 = vor.u32 %v380, 8388608
        %v382 = vsub.s32 0, %v381
        %v383 = vadd.s32 %v378, 1
        %vm384 = vcmp.gt.s32.totalorder %v383, 0
        %v385 = vsel %vm384, %v383, 0
        %v386 = vshrl.u32 %v385, 5
        %v387 = vand.u32 %v385, 31
        %v388 = vsub.s32 32, %v387
        %v389 = vshrl.u32 683565275, %v388
        %v390 = vshll.u32 683565275, %v387
        %v391 = vshrl.u32 2475754826, %v388
        %v392 = vor.u32 %v390, %v391
        %v393 = vshll.u32 2475754826, %v387
        %v394 = vshrl.u32 2131351028, %v388
        %v395 = vor.u32 %v393, %v394
        %v396 = vshll.u32 2131351028, %v387
        %v397 = vshrl.u32 2102212464, %v388
        %v398 = vor.u32 %v396, %v397
        %v399 = vshll.u32 2102212464, %v387
        %v400 = vshrl.u32 920167782, %v388
        %v401 = vor.u32 %v399, %v400
        %v402 = vshll.u32 920167782, %v387
        %v403 = vshrl.u32 1326507024, %v388
        %v404 = vor.u32 %v402, %v403
        %vm405 = vcmp.lt.s32.totalorder %v386, 1
        %vm406 = vcmp.lt.s32.totalorder %v386, 2
        %vm407 = vcmp.lt.s32.totalorder %v386, 3
        %vm408 = vcmp.lt.s32.totalorder %v386, 4
        %v409 = vsel %vm405, %v389, %v392
        %v410 = vsel %vm408, %v398, 2102212464
        %v411 = vsel %vm407, %v395, %v410
        %v412 = vsel %vm406, %v409, %v411
        %v413 = vsel %vm405, %v392, %v395
        %v414 = vsel %vm408, %v401, 920167782
        %v415 = vsel %vm407, %v398, %v414
        %v416 = vsel %vm406, %v413, %v415
        %v417 = vsel %vm405, %v395, %v398
        %v418 = vsel %vm408, %v404, 1326507024
        %v419 = vsel %vm407, %v401, %v418
        %v420 = vsel %vm406, %v417, %v419
        %v421 = vshll.u32 %v381, 8
        %v422 = vmul.u32.u64.compose %v421, %v420
        %v423 = vextract.low.u32 %v422
        %v424 = vextract.high.u32 %v422
        %v425 = vmul.u32.u64.compose %v421, %v416
        %v426 = vextract.low.u32 %v425
        %v427 = vextract.high.u32 %v425
        %v428 = vmul.u32 %v421, %v412
        %v429 = vadd.s32 %v424, %v426
        %vm430 = vc.u32 %v424, %v426
        %v431 = vadd.s32 %v427, 1
        %v432 = vsel %vm430, %v431, %v427
        %v433 = vadd.s32 %v428, %v432
        %v434 = vadd.s32 %v433, 536870912
        %v435 = vshrl.u32 %v434, 30
        %v436 = vshll.u32 %v435, 30
        %v437 = vsub.s32 %v433, %v436
        %vm438 = vcmp.lt.s32.totalorder %v437, 0
        %v439 = vsub.s32 0, %v437
        %v440 = vsel %vm438, %v439, %v437
        %v441 = vclz %v440
        %v442 = vsub.s32 %v441, 2
        %vm443 = vcmp.gt.s32.totalorder 0, %v442
        %v444 = vsel %vm443, 0, %v442
        %v445 = vsub.s32 32, %v444
        %v446 = vshll.u32 %v437, %v444
        %v447 = vshrl.u32 %v429, %v445
        %v448 = vor.u32 %v446, %v447
        %v449 = vsub.s32 4294967266, %v444
        %v450 = vadd.s32 %v449, 127
        %v451 = vshll.u32 %v450, 23
        %v452 = vor.u32 4788187, %v451
        %v453 = vand.u32 2147483647, %v452
        %v455 = vcvt.s32.f32 %v448
        %v456 = vmul.f32 %v455, %v453
        %v457 = vxor.u32 %v456, 2147483648
        %v458 = vsel %vm375, %v457, %v456
        %v459 = vsub.s32 4, %v435
        %v460 = vsel %vm375, %v459, %v435
        %v461 = vsel %vm374, %v329, %v458
        %v462 = vsel %vm374, 0, %v460
        %v463 = vcosq.f32.pop %v461
        %v464 = vsinq.f32.pop %v461
        %vm465 = vweird.f32 %v329
        %v466 = vand.u32 %v462, 3
        %vm467 = vcmp.lt.s32.totalorder %v466, 2
        %vm468 = vcmp.eq.s32.totalorder %v466, 0
        %v469 = vxor.u32 %v464, 2147483648
        %v470 = vsel %vm468, %v463, %v469
        %vm471 = vcmp.eq.s32.totalorder %v466, 2
        %v472 = vxor.u32 %v463, 2147483648
        %v473 = vsel %vm471, %v472, %v464
        %v474 = vsel %vm467, %v470, %v473
        %v475 = vsel %vm465, nan, %v474
        %v476 = vand.u32 2147483647, %v330
        %vm477 = vcmp.le.f32.partialorder %v476, 0.7853982
        %vm478 = vcmp.lt.s32.totalorder %v330, 0
        %v479 = vand.u32 %v330, 2139095040
        %v480 = vshrl.u32 %v479, 23
        %v481 = vsub.s32 %v480, 127
        %v482 = vand.u32 2147483647, %v330
        %v483 = vand.u32 %v482, 8388607
        %v484 = vor.u32 %v483, 8388608
        %v485 = vsub.s32 0, %v484
        %v486 = vadd.s32 %v481, 1
        %vm487 = vcmp.gt.s32.totalorder %v486, 0
        %v488 = vsel %vm487, %v486, 0
        %v489 = vshrl.u32 %v488, 5
        %v490 = vand.u32 %v488, 31
        %v491 = vsub.s32 32, %v490
        %v492 = vshrl.u32 683565275, %v491
        %v493 = vshll.u32 683565275, %v490
        %v494 = vshrl.u32 2475754826, %v491
        %v495 = vor.u32 %v493, %v494
        %v496 = vshll.u32 2475754826, %v490
        %v497 = vshrl.u32 2131351028, %v491
        %v498 = vor.u32 %v496, %v497
        %v499 = vshll.u32 2131351028, %v490
        %v500 = vshrl.u32 2102212464, %v491
        %v501 = vor.u32 %v499, %v500
        %v502 = vshll.u32 2102212464, %v490
        %v503 = vshrl.u32 920167782, %v491
        %v504 = vor.u32 %v502, %v503
        %v505 = vshll.u32 920167782, %v490
        %v506 = vshrl.u32 1326507024, %v491
        %v507 = vor.u32 %v505, %v506
        %vm508 = vcmp.lt.s32.totalorder %v489, 1
        %vm509 = vcmp.lt.s32.totalorder %v489, 2
        %vm510 = vcmp.lt.s32.totalorder %v489, 3
        %vm511 = vcmp.lt.s32.totalorder %v489, 4
        %v512 = vsel %vm508, %v492, %v495
        %v513 = vsel %vm511, %v501, 2102212464
        %v514 = vsel %vm510, %v498, %v513
        %v515 = vsel %vm509, %v512, %v514
        %v516 = vsel %vm508, %v495, %v498
        %v517 = vsel %vm511, %v504, 920167782
        %v518 = vsel %vm510, %v501, %v517
        %v519 = vsel %vm509, %v516, %v518
        %v520 = vsel %vm508, %v498, %v501
        %v521 = vsel %vm511, %v507, 1326507024
        %v522 = vsel %vm510, %v504, %v521
        %v523 = vsel %vm509, %v520, %v522
        %v524 = vshll.u32 %v484, 8
        %v525 = vmul.u32.u64.compose %v524, %v523
        %v526 = vextract.low.u32 %v525
        %v527 = vextract.high.u32 %v525
        %v528 = vmul.u32.u64.compose %v524, %v519
        %v529 = vextract.low.u32 %v528
        %v530 = vextract.high.u32 %v528
        %v531 = vmul.u32 %v524, %v515
        %v532 = vadd.s32 %v527, %v529
        %vm533 = vc.u32 %v527, %v529
        %v534 = vadd.s32 %v530, 1
        %v535 = vsel %vm533, %v534, %v530
        %v536 = vadd.s32 %v531, %v535
        %v537 = vadd.s32 %v536, 536870912
        %v538 = vshrl.u32 %v537, 30
        %v539 = vshll.u32 %v538, 30
        %v540 = vsub.s32 %v536, %v539
        %vm541 = vcmp.lt.s32.totalorder %v540, 0
        %v542 = vsub.s32 0, %v540
        %v543 = vsel %vm541, %v542, %v540
        %v544 = vclz %v543
        %v545 = vsub.s32 %v544, 2
        %vm546 = vcmp.gt.s32.totalorder 0, %v545
        %v547 = vsel %vm546, 0, %v545
        %v548 = vsub.s32 32, %v547
        %v549 = vshll.u32 %v540, %v547
        %v550 = vshrl.u32 %v532, %v548
        %v551 = vor.u32 %v549, %v550
        %v552 = vsub.s32 4294967266, %v547
        %v553 = vadd.s32 %v552, 127
        %v554 = vshll.u32 %v553, 23
        %v555 = vor.u32 4788187, %v554
        %v556 = vand.u32 2147483647, %v555
        %v558 = vcvt.s32.f32 %v551
        %v559 = vmul.f32 %v558, %v556
        %v560 = vxor.u32 %v559, 2147483648
        %v561 = vsel %vm478, %v560, %v559
        %v562 = vsub.s32 4, %v538
        %v563 = vsel %vm478, %v562, %v538
        %v564 = vsel %vm477, %v330, %v561
        %v565 = vsel %vm477, 0, %v563
        %v566 = vcosq.f32.pop %v564
        %v567 = vsinq.f32.pop %v564
        %vm568 = vweird.f32 %v330
        %v569 = vand.u32 %v565, 3
        %vm570 = vcmp.lt.s32.totalorder %v569, 2
        %vm571 = vcmp.eq.s32.totalorder %v569, 0
        %v572 = vxor.u32 %v567, 2147483648
        %v573 = vsel %vm571, %v566, %v572
        %vm574 = vcmp.eq.s32.totalorder %v569, 2
        %v575 = vxor.u32 %v566, 2147483648
        %v576 = vsel %vm574, %v575, %v567
        %v577 = vsel %vm570, %v573, %v576
        %v578 = vsel %vm568, nan, %v577
        %v579 = vand.u32 2147483647, %v331
        %vm580 = vcmp.le.f32.partialorder %v579, 0.7853982
        %vm581 = vcmp.lt.s32.totalorder %v331, 0
        %v582 = vand.u32 %v331, 2139095040
        %v583 = vshrl.u32 %v582, 23
        %v584 = vsub.s32 %v583, 127
        %v585 = vand.u32 2147483647, %v331
        %v586 = vand.u32 %v585, 8388607
        %v587 = vor.u32 %v586, 8388608
        %v588 = vsub.s32 0, %v587
        %v589 = vadd.s32 %v584, 1
        %vm590 = vcmp.gt.s32.totalorder %v589, 0
        %v591 = vsel %vm590, %v589, 0
        %v592 = vshrl.u32 %v591, 5
        %v593 = vand.u32 %v591, 31
        %v594 = vsub.s32 32, %v593
        %v595 = vshrl.u32 683565275, %v594
        %v596 = vshll.u32 683565275, %v593
        %v597 = vshrl.u32 2475754826, %v594
        %v598 = vor.u32 %v596, %v597
        %v599 = vshll.u32 2475754826, %v593
        %v600 = vshrl.u32 2131351028, %v594
        %v601 = vor.u32 %v599, %v600
        %v602 = vshll.u32 2131351028, %v593
        %v603 = vshrl.u32 2102212464, %v594
        %v604 = vor.u32 %v602, %v603
        %v605 = vshll.u32 2102212464, %v593
        %v606 = vshrl.u32 920167782, %v594
        %v607 = vor.u32 %v605, %v606
        %v608 = vshll.u32 920167782, %v593
        %v609 = vshrl.u32 1326507024, %v594
        %v610 = vor.u32 %v608, %v609
        %vm611 = vcmp.lt.s32.totalorder %v592, 1
        %vm612 = vcmp.lt.s32.totalorder %v592, 2
        %vm613 = vcmp.lt.s32.totalorder %v592, 3
        %vm614 = vcmp.lt.s32.totalorder %v592, 4
        %v615 = vsel %vm611, %v595, %v598
        %v616 = vsel %vm614, %v604, 2102212464
        %v617 = vsel %vm613, %v601, %v616
        %v618 = vsel %vm612, %v615, %v617
        %v619 = vsel %vm611, %v598, %v601
        %v620 = vsel %vm614, %v607, 920167782
        %v621 = vsel %vm613, %v604, %v620
        %v622 = vsel %vm612, %v619, %v621
        %v623 = vsel %vm611, %v601, %v604
        %v624 = vsel %vm614, %v610, 1326507024
        %v625 = vsel %vm613, %v607, %v624
        %v626 = vsel %vm612, %v623, %v625
        %v627 = vshll.u32 %v587, 8
        %v628 = vmul.u32.u64.compose %v627, %v626
        %v629 = vextract.low.u32 %v628
        %v630 = vextract.high.u32 %v628
        %v631 = vmul.u32.u64.compose %v627, %v622
        %v632 = vextract.low.u32 %v631
        %v633 = vextract.high.u32 %v631
        %v634 = vmul.u32 %v627, %v618
        %v635 = vadd.s32 %v630, %v632
        %vm636 = vc.u32 %v630, %v632
        %v637 = vadd.s32 %v633, 1
        %v638 = vsel %vm636, %v637, %v633
        %v639 = vadd.s32 %v634, %v638
        %v640 = vadd.s32 %v639, 536870912
        %v641 = vshrl.u32 %v640, 30
        %v642 = vshll.u32 %v641, 30
        %v643 = vsub.s32 %v639, %v642
        %vm644 = vcmp.lt.s32.totalorder %v643, 0
        %v645 = vsub.s32 0, %v643
        %v646 = vsel %vm644, %v645, %v643
        %v647 = vclz %v646
        %v648 = vsub.s32 %v647, 2
        %vm649 = vcmp.gt.s32.totalorder 0, %v648
        %v650 = vsel %vm649, 0, %v648
        %v651 = vsub.s32 32, %v650
        %v652 = vshll.u32 %v643, %v650
        %v653 = vshrl.u32 %v635, %v651
        %v654 = vor.u32 %v652, %v653
        %v655 = vsub.s32 4294967266, %v650
        %v656 = vadd.s32 %v655, 127
        %v657 = vshll.u32 %v656, 23
        %v658 = vor.u32 4788187, %v657
        %v659 = vand.u32 2147483647, %v658
        %v661 = vcvt.s32.f32 %v654
        %v662 = vmul.f32 %v661, %v659
        %v663 = vxor.u32 %v662, 2147483648
        %v664 = vsel %vm581, %v663, %v662
        %v665 = vsub.s32 4, %v641
        %v666 = vsel %vm581, %v665, %v641
        %v667 = vsel %vm580, %v331, %v664
        %v668 = vsel %vm580, 0, %v666
        %v669 = vcosq.f32.pop %v667
        %v670 = vsinq.f32.pop %v667
        %vm671 = vweird.f32 %v331
        %v672 = vand.u32 %v668, 3
        %vm673 = vcmp.lt.s32.totalorder %v672, 2
        %vm674 = vcmp.eq.s32.totalorder %v672, 0
        %v675 = vxor.u32 %v670, 2147483648
        %v676 = vsel %vm674, %v669, %v675
        %vm677 = vcmp.eq.s32.totalorder %v672, 2
        %v678 = vxor.u32 %v669, 2147483648
        %v679 = vsel %vm677, %v678, %v670
        %v680 = vsel %vm673, %v676, %v679
        %v681 = vsel %vm671, nan, %v680
        %v682 = vand.u32 2147483647, %v332
        %vm683 = vcmp.le.f32.partialorder %v682, 0.7853982
        %vm684 = vcmp.lt.s32.totalorder %v332, 0
        %v685 = vand.u32 %v332, 2139095040
        %v686 = vshrl.u32 %v685, 23
        %v687 = vsub.s32 %v686, 127
        %v688 = vand.u32 2147483647, %v332
        %v689 = vand.u32 %v688, 8388607
        %v690 = vor.u32 %v689, 8388608
        %v691 = vsub.s32 0, %v690
        %v692 = vadd.s32 %v687, 1
        %vm693 = vcmp.gt.s32.totalorder %v692, 0
        %v694 = vsel %vm693, %v692, 0
        %v695 = vshrl.u32 %v694, 5
        %v696 = vand.u32 %v694, 31
        %v697 = vsub.s32 32, %v696
        %v698 = vshrl.u32 683565275, %v697
        %v699 = vshll.u32 683565275, %v696
        %v700 = vshrl.u32 2475754826, %v697
        %v701 = vor.u32 %v699, %v700
        %v702 = vshll.u32 2475754826, %v696
        %v703 = vshrl.u32 2131351028, %v697
        %v704 = vor.u32 %v702, %v703
        %v705 = vshll.u32 2131351028, %v696
        %v706 = vshrl.u32 2102212464, %v697
        %v707 = vor.u32 %v705, %v706
        %v708 = vshll.u32 2102212464, %v696
        %v709 = vshrl.u32 920167782, %v697
        %v710 = vor.u32 %v708, %v709
        %v711 = vshll.u32 920167782, %v696
        %v712 = vshrl.u32 1326507024, %v697
        %v713 = vor.u32 %v711, %v712
        %vm714 = vcmp.lt.s32.totalorder %v695, 1
        %vm715 = vcmp.lt.s32.totalorder %v695, 2
        %vm716 = vcmp.lt.s32.totalorder %v695, 3
        %vm717 = vcmp.lt.s32.totalorder %v695, 4
        %v718 = vsel %vm714, %v698, %v701
        %v719 = vsel %vm717, %v707, 2102212464
        %v720 = vsel %vm716, %v704, %v719
        %v721 = vsel %vm715, %v718, %v720
        %v722 = vsel %vm714, %v701, %v704
        %v723 = vsel %vm717, %v710, 920167782
        %v724 = vsel %vm716, %v707, %v723
        %v725 = vsel %vm715, %v722, %v724
        %v726 = vsel %vm714, %v704, %v707
        %v727 = vsel %vm717, %v713, 1326507024
        %v728 = vsel %vm716, %v710, %v727
        %v729 = vsel %vm715, %v726, %v728
        %v730 = vshll.u32 %v690, 8
        %v731 = vmul.u32.u64.compose %v730, %v729
        %v732 = vextract.low.u32 %v731
        %v733 = vextract.high.u32 %v731
        %v734 = vmul.u32.u64.compose %v730, %v725
        %v735 = vextract.low.u32 %v734
        %v736 = vextract.high.u32 %v734
        %v737 = vmul.u32 %v730, %v721
        %v738 = vadd.s32 %v733, %v735
        %vm739 = vc.u32 %v733, %v735
        %v740 = vadd.s32 %v736, 1
        %v741 = vsel %vm739, %v740, %v736
        %v742 = vadd.s32 %v737, %v741
        %v743 = vadd.s32 %v742, 536870912
        %v744 = vshrl.u32 %v743, 30
        %v745 = vshll.u32 %v744, 30
        %v746 = vsub.s32 %v742, %v745
        %vm747 = vcmp.lt.s32.totalorder %v746, 0
        %v748 = vsub.s32 0, %v746
        %v749 = vsel %vm747, %v748, %v746
        %v750 = vclz %v749
        %v751 = vsub.s32 %v750, 2
        %vm752 = vcmp.gt.s32.totalorder 0, %v751
        %v753 = vsel %vm752, 0, %v751
        %v754 = vsub.s32 32, %v753
        %v755 = vshll.u32 %v746, %v753
        %v756 = vshrl.u32 %v738, %v754
        %v757 = vor.u32 %v755, %v756
        %v758 = vsub.s32 4294967266, %v753
        %v759 = vadd.s32 %v758, 127
        %v760 = vshll.u32 %v759, 23
        %v761 = vor.u32 4788187, %v760
        %v762 = vand.u32 2147483647, %v761
        %v764 = vcvt.s32.f32 %v757
        %v765 = vmul.f32 %v764, %v762
        %v766 = vxor.u32 %v765, 2147483648
        %v767 = vsel %vm684, %v766, %v765
        %v768 = vsub.s32 4, %v744
        %v769 = vsel %vm684, %v768, %v744
        %v770 = vsel %vm683, %v332, %v767
        %v771 = vsel %vm683, 0, %v769
        %v772 = vcosq.f32.pop %v770
        %v773 = vsinq.f32.pop %v770
        %vm774 = vweird.f32 %v332
        %v775 = vand.u32 %v771, 3
        %vm776 = vcmp.lt.s32.totalorder %v775, 2
        %vm777 = vcmp.eq.s32.totalorder %v775, 0
        %v778 = vxor.u32 %v773, 2147483648
        %v779 = vsel %vm777, %v772, %v778
        %vm780 = vcmp.eq.s32.totalorder %v775, 2
        %v781 = vxor.u32 %v772, 2147483648
        %v782 = vsel %vm780, %v781, %v773
        %v783 = vsel %vm776, %v779, %v782
        %v784 = vsel %vm774, nan, %v783
        %vm785 = vcmp.lt.f32.partialorder %v329, 3.1415927
        %vm786 = vcmp.lt.f32.partialorder %v330, 3.1415927
        %vm787 = vcmp.lt.f32.partialorder %v331, 3.1415927
        %vm788 = vcmp.lt.f32.partialorder %v332, 3.1415927
        %v789 = vsel %vm785, 1.0, -1.0
        %v790 = vsel %vm786, 1.0, -1.0
        %v791 = vsel %vm787, 1.0, -1.0
        %v792 = vsel %vm788, 1.0, -1.0
        %v793 = vmul.f32 %v475, %v475
        %v794 = vmul.f32 %v578, %v578
        %v795 = vmul.f32 %v681, %v681
        %v796 = vmul.f32 %v784, %v784
        %v797 = vsub.f32 1.0, %v793
        %v798 = vsub.f32 1.0, %v794
        %v799 = vsub.f32 1.0, %v795
        %v800 = vsub.f32 1.0, %v796
        %v801 = vmax.f32 %v797, 0.0
        %v802 = vmax.f32 %v798, 0.0
        %v803 = vmax.f32 %v799, 0.0
        %v804 = vmax.f32 %v800, 0.0
        %v805 = vrsqrt.pop %v801
        %v806 = vmul.f32 %v801, %v805
        %vm807 = vcmp.eq.f32.partialorder %v801, inf
        %v808 = vsel %vm807, %v801, %v806
        %vm809 = vcmp.eq.f32.partialorder %v801, 0.0
        %v810 = vand.u32 %v801, 2147483648
        %v811 = vsel %vm809, %v810, %v808
        %v812 = vrsqrt.pop %v802
        %v813 = vmul.f32 %v802, %v812
        %vm814 = vcmp.eq.f32.partialorder %v802, inf
        %v815 = vsel %vm814, %v802, %v813
        %vm816 = vcmp.eq.f32.partialorder %v802, 0.0
        %v817 = vand.u32 %v802, 2147483648
        %v818 = vsel %vm816, %v817, %v815
        %v819 = vrsqrt.pop %v803
        %v820 = vmul.f32 %v803, %v819
        %vm821 = vcmp.eq.f32.partialorder %v803, inf
        %v822 = vsel %vm821, %v803, %v820
        %vm823 = vcmp.eq.f32.partialorder %v803, 0.0
        %v824 = vand.u32 %v803, 2147483648
        %v825 = vsel %vm823, %v824, %v822
        %v826 = vrsqrt.pop %v804
        %v827 = vmul.f32 %v804, %v826
        %vm828 = vcmp.eq.f32.partialorder %v804, inf
        %v829 = vsel %vm828, %v804, %v827
        %vm830 = vcmp.eq.f32.partialorder %v804, 0.0
        %v831 = vand.u32 %v804, 2147483648
        %v832 = vsel %vm830, %v831, %v829
        %v833 = vmul.f32 %v789, %v811
        %v834 = vmul.f32 %v790, %v818
        %v835 = vmul.f32 %v791, %v825
        %v836 = vmul.f32 %v792, %v832
        %v837 = vld [vmem:[#allocation4] sm:$0xff]
        %v838 = vld [vmem:[#allocation4 + $0x8] sm:$0xff]
        %v839 = vld [vmem:[#allocation4 + $0x10] sm:$0xff]
        %v840 = vld [vmem:[#allocation4 + $0x18] sm:$0xff]
        %v841 = vmul.f32 %v351, %v475
        %v842 = vmul.f32 %v358, %v578
        %v843 = vmul.f32 %v365, %v681
        %v844 = vmul.f32 %v372, %v784
        %v845 = vstv %s292
        %v846 = vmul.f32 %v845, %v841
        %v847 = vmul.f32 %v845, %v842
        %v848 = vmul.f32 %v845, %v843
        %v849 = vmul.f32 %v845, %v844
        %v850 = vadd.f32 %v837, %v846
        %v851 = vadd.f32 %v838, %v847
        %v852 = vadd.f32 %v839, %v848
        %v853 = vadd.f32 %v840, %v849
        %854 = vst [vmem:[%s188] sm:$0xff] %v850
        %855 = vst [vmem:[%s188 + $0x8] sm:$0xff] %v851
        %856 = vst [vmem:[%s188 + $0x10] sm:$0xff] %v852
        %857 = vst [vmem:[%s188 + $0x18] sm:$0xff] %v853
        %v858 = vld [vmem:[#allocation4 + $0x20] sm:$0xff]
        %v859 = vld [vmem:[#allocation4 + $0x28] sm:$0xff]
        %v860 = vld [vmem:[#allocation4 + $0x30] sm:$0xff]
        %v861 = vld [vmem:[#allocation4 + $0x38] sm:$0xff]
        %v862 = vmul.f32 %v351, %v833
        %v863 = vmul.f32 %v358, %v834
        %v864 = vmul.f32 %v365, %v835
        %v865 = vmul.f32 %v372, %v836
        %v866 = vmul.f32 %v845, %v862
        %v867 = vmul.f32 %v845, %v863
        %v868 = vmul.f32 %v845, %v864
        %v869 = vmul.f32 %v845, %v865
        %v870 = vadd.f32 %v858, %v866
        %v871 = vadd.f32 %v859, %v867
        %v872 = vadd.f32 %v860, %v868
        %v873 = vadd.f32 %v861, %v869
        %874 = vst [vmem:[%s188 + $0x20] sm:$0xff] %v870
        %875 = vst [vmem:[%s188 + $0x28] sm:$0xff] %v871
        %876 = vst [vmem:[%s188 + $0x30] sm:$0xff] %v872
        %877 = vst [vmem:[%s188 + $0x38] sm:$0xff] %v873
        %s878 = sand.u32 %s110, 1
        %s879 = scalar_lea.sflag [#allocation6], %s878
        %s880 = sand.u32 %s110, 1
        %s881 = smul.addr %s880, 64
        %s882 = scalar_lea.vmem [#allocation7], %s881
        // Predicated region
        $region37: #{tpu_custom_call.1} parent=31 // pred_check
          %p883 = pneg %p120
        $region38: #{tpu_custom_call.1} parent=31 // pred_check_branch
          %885 = sbr.rel (%p883) target = $region40
        $region39: #{tpu_custom_call.1} parent=31 // pred_region
          %s886 = smul.u32 2, %s25
          %s888 = ssub.s32 1024, 1024
          %889 = vsyncadd %s879, %s888
          %s890 = smul.addr %s886, 4
          %s891 = smul.addr %s24, 8
          %s892 = sadd.s32 %s890, %s891
          %s893 = smul.addr %s892, 128
          %s894 = scalar_lea.hbm %s3, %s893
          %s895 = sshll.u32 %s882, 4
          %s896 = int_to_ptr.vmem [resolvable:$true] %s895
          %901 = dma.vmem_to_hbm [thread:$0]  %s896, 1024, %s894, %s879, 512, 512, 32
        $region40: #{tpu_custom_call.1} parent=31 // pred_fallthru
          _
      $region32: #{tpu_custom_call.1} parent=5 // pred_fallthru
        _
      %p902 = scmp.le.s32.totalorder 2, %s15
      // Predicated region
      $region41: #{tpu_custom_call.1} parent=5 // pred_check
        %p903 = pneg %p902
      $region42: #{tpu_custom_call.1} parent=5 // pred_check_branch
        %905 = sbr.rel (%p903) target = $region44
      $region43: #{tpu_custom_call.1} parent=5 // pred_region
        %s906 = ssub.s32 %s15, 2
        // Predicated region
        $region45: #{tpu_custom_call.1} parent=43 // pred_check
          %p907 = pneg %p126
        $region46: #{tpu_custom_call.1} parent=43 // pred_check_branch
          %909 = sbr.rel (%p907) target = $region48
        $region47: #{tpu_custom_call.1} parent=43 // pred_region
          %s910 = sand.u32 %s111, 1
          %s911 = scalar_lea.sflag [#allocation6], %s910
          %s912 = sand.u32 %s111, 1
          %s913 = smul.addr %s912, 64
          %s914 = scalar_lea.vmem [#allocation7], %s913
          %915 = dma.done %s911, 1024
        $region48: #{tpu_custom_call.1} parent=43 // pred_fallthru
          _
      $region44: #{tpu_custom_call.1} parent=5 // pred_fallthru
        _
    $region6: #{tpu_custom_call.1} parent=1 // loop_footer
      %s19 = sadd.s32 1, %s15
    $region7: #{tpu_custom_call.1} parent=1 // loop_footer_branch
      %14 = sbr.rel target = $region3
    $region8: #{tpu_custom_call.1} parent=1 // loop_exit
      _
    %916 = vsyncpa [#allocation5], 1
    %s917 = scalar_lea.sflag [#allocation5], 1
    %918 = vsyncpa %s917, 1
    %919 = vsyncpa [#allocation6], 1
    %s920 = scalar_lea.sflag [#allocation6], 1
    %921 = vsyncpa %s920, 1

</llo_original>
